<compile_context>
chip_gen: v5e
topology: v5e:2x2
jax: 0.10.0
libtpu: 0.0.40
codegen_flags: <defaults>
</compile_context>

<pallas_src>
import jax
import jax.numpy as jnp
from jax.experimental import pallas as pl
from jax.experimental.pallas import tpu as pltpu


_LANE = 128
_SUBLANE = 8
_INPUT_TILE_TARGET_BYTES = 1 << 20   # ~1 MiB per (TB, C) input buffer
_VMEM_SOFT_CAP_BYTES = 32 << 20      # live per-step budget, safe on v7x (64 MiB/TC)
_VMEM_LIMIT_BYTES = 48 << 20         # scoped limit; headroom but under v7x physical
_MIN_GRID_STEPS = 8                  # keep the pipeline fed; >=2 steps/TC on v7x


def _rao_kernel(preds_ref, nat_ref, out_ref):
    """Per-row Bhattacharyya coefficient: sum_c sqrt(softmax(nat) * softmax(preds))."""
    preds = preds_ref[...].astype(jnp.float32)   # (TB, C)
    nat = nat_ref[...].astype(jnp.float32)       # (TB, C)

    # Stable shifted logits (normalization deferred to one per-row sqrt+divide).
    p_shift = preds - jnp.max(preds, axis=1, keepdims=True)
    n_shift = nat - jnp.max(nat, axis=1, keepdims=True)

    zp = jnp.sum(jnp.exp(p_shift), axis=1, keepdims=True)   # (TB, 1)
    zn = jnp.sum(jnp.exp(n_shift), axis=1, keepdims=True)   # (TB, 1)

    # sum_c sqrt(exp(ps)*exp(ns)) == sum_c exp(0.5*(ps+ns)): no product temporary.
    s = jnp.sum(jnp.exp(0.5 * (p_shift + n_shift)), axis=1, keepdims=True)

    # Exact f32 sqrt + divide on (TB,1) values (avoid approximate EUP rsqrt;
    # acos is ill-conditioned near x=1).
    out_ref[...] = s / jnp.sqrt(zp * zn)


def _pick_batch_tile(B, C, in_itemsize):
    """Small-tile heuristic: ~1 MiB input tiles, >=8 grid steps, honest VMEM budget."""
    c_pad = pl.cdiv(C, _LANE) * _LANE                 # lane-padded class dim
    in_row_bytes = c_pad * in_itemsize                # one input row, one buffer
    # Live bytes one grid step keeps per batch row:
    #   2 inputs x Buffered(2) in input dtype + ~4 f32 (TB, c_pad) intermediates.
    live_row_bytes = c_pad * (4 * in_itemsize + 4 * 4)

    tb = max(_INPUT_TILE_TARGET_BYTES // max(in_row_bytes, 1), 1)
    if B >= _MIN_GRID_STEPS * _SUBLANE:
        tb = min(tb, B // _MIN_GRID_STEPS)            # keep >= 8 grid steps
    tb = min(tb, max(_VMEM_SOFT_CAP_BYTES // max(live_row_bytes, 1), 1))
    tb = max((tb // _SUBLANE) * _SUBLANE, _SUBLANE)   # sublane-aligned
    if tb >= B:
        return B       # genuinely tiny batch: one full block (no (8,128) rule)
    return tb


def rao_loss(preds, nat, block_rows=None):
    """Pallas-backed RaoLoss forward. preds, nat: (B, C) logits -> scalar float32.

    bf16 logits are accepted as-is (do not pre-upcast); the kernel computes in f32.
    """
    assert preds.shape == nat.shape and preds.ndim == 2
    B, C = preds.shape
    TB = block_rows if block_rows is not None else _pick_batch_tile(
        B, C, jnp.dtype(preds.dtype).itemsize)
    grid = (pl.cdiv(B, TB),)

    sqroot_prod = pl.pallas_call(
        _rao_kernel,
        out_shape=jax.ShapeDtypeStruct((B, 1), jnp.float32),
        grid=grid,
        in_specs=[
            pl.BlockSpec((TB, C), lambda i: (i, 0)),
            pl.BlockSpec((TB, C), lambda i: (i, 0)),
        ],
        out_specs=pl.BlockSpec((TB, 1), lambda i: (i, 0)),
        compiler_params=pltpu.CompilerParams(
            dimension_semantics=("parallel",),
            vmem_limit_bytes=_VMEM_LIMIT_BYTES,
        ),
    )(preds, nat)

    # TODO(synk): acos has no Pallas-TPU lowering; finalize in plain JAX.
    eps = 1e-6
    rao = jnp.sum(jnp.arccos(jnp.clip(sqroot_prod[:, 0] - eps, 0.0, 1.0)), axis=0)
    return rao


def _rao_loss_ref(preds, nat):
    """Pure-JAX reference mirroring the PyTorch module exactly."""
    eps = 1e-6
    sqroot_prod = jnp.sum(
        jnp.sqrt(jax.nn.softmax(nat.astype(jnp.float32), axis=1)
                 * jax.nn.softmax(preds.astype(jnp.float32), axis=1)),
        axis=1,
    )
    return jnp.sum(jnp.arccos(jnp.clip(sqroot_prod - eps, 0.0, 1.0)), axis=0)


if __name__ == "__main__":
    key = jax.random.PRNGKey(0)
    k1, k2, k3, k4 = jax.random.split(key, 4)

    # Small case consistent with the module: single full-block path.
    B, C = 8, 32
    preds = jax.random.normal(k1, (B, C), dtype=jnp.float32)
    nat = jax.random.normal(k2, (B, C), dtype=jnp.float32)
    out = jax.block_until_ready(rao_loss(preds, nat))
    ref = jax.block_until_ready(_rao_loss_ref(preds, nat))
    assert out.shape == (), f"expected scalar, got {out.shape}"
    assert jnp.allclose(out, ref, atol=1e-4, rtol=1e-4), (out, ref)

    # Auto-tiled path: bf16 logits kept on the wire, multi-step grid with a
    # ragged tail block (B=300 is not a multiple of the chosen TB).
    B2, C2 = 300, 128
    preds2 = jax.random.normal(k3, (B2, C2), dtype=jnp.bfloat16)
    nat2 = jax.random.normal(k4, (B2, C2), dtype=jnp.bfloat16)
    out2 = jax.block_until_ready(rao_loss(preds2, nat2))
    ref2 = jax.block_until_ready(_rao_loss_ref(preds2, nat2))
    assert jnp.allclose(out2, ref2, atol=1e-2, rtol=1e-3), (out2, ref2)

    # Explicit tile override cross-check (exercises a different tiling of the
    # same data; result must be identical up to f32 rounding).
    out3 = jax.block_until_ready(rao_loss(preds2, nat2, block_rows=64))
    assert jnp.allclose(out3, ref2, atol=1e-2, rtol=1e-3), (out3, ref2)

    print("KERNEL_OK")
</pallas_src>

<mosaic_0001>
module attributes {stable_mosaic.version = 11 : i64} {
  func.func @_rao_kernel(%arg0: i32, %arg1: memref<8x32xf32, #tpu.memory_space<vmem>>, %arg2: memref<8x32xf32, #tpu.memory_space<vmem>>, %arg3: memref<8x1xf32, #tpu.memory_space<vmem>>) attributes {dimension_semantics = [#tpu.dimension_semantics<parallel>], iteration_bounds = array<i64: 1>, scalar_prefetch = 0 : i64, scratch_operands = 0 : i64, tpu.core_type = #tpu.core_type<tc>, window_params = [{transform_indices = @transform_0, window_bounds = array<i64: 8, 32>}, {transform_indices = @transform_1, window_bounds = array<i64: 8, 32>}, {transform_indices = @transform_2, window_bounds = array<i64: 8, 1>}]} {
    %c0 = arith.constant 0 : index
    %c0_0 = arith.constant 0 : index
    %0 = vector.load %arg1[%c0, %c0_0] : memref<8x32xf32, #tpu.memory_space<vmem>>, vector<8x32xf32>
    %c0_1 = arith.constant 0 : index
    %c0_2 = arith.constant 0 : index
    %1 = vector.load %arg2[%c0_1, %c0_2] : memref<8x32xf32, #tpu.memory_space<vmem>>, vector<8x32xf32>
    %cst = arith.constant dense<0xFF800000> : vector<8xf32>
    %2 = vector.multi_reduction <maximumf>, %0, %cst [1] : vector<8x32xf32> to vector<8xf32>
    %3 = vector.shape_cast %2 : vector<8xf32> to vector<8x1xf32>
    %4 = vector.broadcast %3 : vector<8x1xf32> to vector<8x32xf32>
    %5 = arith.subf %0, %4 : vector<8x32xf32>
    %cst_3 = arith.constant dense<0xFF800000> : vector<8xf32>
    %6 = vector.multi_reduction <maximumf>, %1, %cst_3 [1] : vector<8x32xf32> to vector<8xf32>
    %7 = vector.shape_cast %6 : vector<8xf32> to vector<8x1xf32>
    %8 = vector.broadcast %7 : vector<8x1xf32> to vector<8x32xf32>
    %9 = arith.subf %1, %8 : vector<8x32xf32>
    %10 = math.exp %5 : vector<8x32xf32>
    %cst_4 = arith.constant dense<0.000000e+00> : vector<8xf32>
    %11 = vector.multi_reduction <add>, %10, %cst_4 [1] : vector<8x32xf32> to vector<8xf32>
    %12 = vector.shape_cast %11 : vector<8xf32> to vector<8x1xf32>
    %13 = math.exp %9 : vector<8x32xf32>
    %cst_5 = arith.constant dense<0.000000e+00> : vector<8xf32>
    %14 = vector.multi_reduction <add>, %13, %cst_5 [1] : vector<8x32xf32> to vector<8xf32>
    %15 = vector.shape_cast %14 : vector<8xf32> to vector<8x1xf32>
    %16 = arith.addf %5, %9 : vector<8x32xf32>
    %cst_6 = arith.constant 5.000000e-01 : f32
    %17 = vector.broadcast %cst_6 : f32 to vector<8x32xf32>
    %18 = arith.mulf %17, %16 : vector<8x32xf32>
    %19 = math.exp %18 : vector<8x32xf32>
    %cst_7 = arith.constant dense<0.000000e+00> : vector<8xf32>
    %20 = vector.multi_reduction <add>, %19, %cst_7 [1] : vector<8x32xf32> to vector<8xf32>
    %21 = vector.shape_cast %20 : vector<8xf32> to vector<8x1xf32>
    %22 = arith.mulf %12, %15 : vector<8x1xf32>
    %23 = math.sqrt %22 : vector<8x1xf32>
    %24 = arith.divf %21, %23 : vector<8x1xf32>
    %c0_8 = arith.constant 0 : index
    %c0_9 = arith.constant 0 : index
    %25 = vector.load %arg3[%c0_8, %c0_9] : memref<8x1xf32, #tpu.memory_space<vmem>>, vector<8x1xf32>
    tpu.vector_store %arg3[%c0_8, %c0_9], %24 {strides = array<i32>} : memref<8x1xf32, #tpu.memory_space<vmem>>, vector<8x1xf32>,
    return
  }
  func.func @transform_0(%arg0: i32) -> (i32, i32) {
    %c0_i32 = arith.constant 0 : i32
    %c0_i32_0 = arith.constant 0 : i32
    return %arg0, %c0_i32 : i32, i32
  }
  func.func @transform_1(%arg0: i32) -> (i32, i32) {
    %c0_i32 = arith.constant 0 : i32
    %c0_i32_0 = arith.constant 0 : i32
    return %arg0, %c0_i32 : i32, i32
  }
  func.func @transform_2(%arg0: i32) -> (i32, i32) {
    %c0_i32 = arith.constant 0 : i32
    %c0_i32_0 = arith.constant 0 : i32
    return %arg0, %c0_i32 : i32, i32
  }
}

</mosaic_0001>

<llo_original>
// kernel: tpu_custom_call.1
$region0: #{tpu_custom_call.1}
  #allocation0 [shape = 'u32[]', space=smem, size = 0x4, offset = 0x4, fixed_abs, tag = 'smem constant byte address 0x4 - core index']
  #allocation1 [shape = 'u32[72,128]{1,0:T(1,128)}', space=vmem, size = 0x9000, scoped, tag = 'internal scratch']
  %s0 = inlined_call_operand.hbm [shape: f32[8,32], index: 0, kind: input, shape index: {}]
  %s1 = inlined_call_operand.hbm [shape: f32[8,32], index: 1, kind: input, shape index: {}]
  %s2 = inlined_call_operand.vmem [shape: f32[8,1], index: 2, kind: output, shape index: {}]
  %s3 = sld [smem:[#allocation0]]
  $region26: #{tpu_custom_call.1} parent=0
    _
  %s5 = ssub.s32 1, %s3
  %s6 = scalar_select 0, %s5, %s3
  $region1: #{tpu_custom_call.1} parent=0
    #allocation2 [shape = 'u8[4096]{0}', space=vmem, size = 0x1000, scoped, tag = 'input window, operand 0, single buffered']
    #allocation3 [shape = 's32[1]{0}', space=sflag, size = 0x4, scoped, tag = 'scoped memory for tpu_custom_call.1']
    #allocation4 [shape = 'u8[4096]{0}', space=vmem, size = 0x1000, scoped, tag = 'input window, operand 1, single buffered']
    #allocation5 [shape = 's32[1]{0}', space=sflag, size = 0x4, scoped, tag = 'scoped memory for tpu_custom_call.1']
    %7 = vsyncpa [#allocation3], 0
    %8 = vsyncpa [#allocation5], 0
    // Predicated region
    $region2: #{tpu_custom_call.1} parent=1 // pred_check
      _
    $region3: #{tpu_custom_call.1} parent=1 // pred_check_branch
      %10 = sbr.rel (0) target = $region5
    $region4: #{tpu_custom_call.1} parent=1 // pred_region
      %12 = vsyncadd [#allocation3], 0
      %s14 = sshll.u32 %s0, 4
      %s15 = int_to_ptr.hbm [resolvable:$true] %s14
      %s16 = sshll.u32 [#allocation2], 4
      %s17 = int_to_ptr.vmem [resolvable:$true] %s16
      %19 = dma.hbm_to_vmem [thread:$0]  %s15, 128, %s17, [#allocation3]
    $region5: #{tpu_custom_call.1} parent=1 // pred_fallthru
      _
    // Predicated region
    $region6: #{tpu_custom_call.1} parent=1 // pred_check
      _
    $region7: #{tpu_custom_call.1} parent=1 // pred_check_branch
      %21 = sbr.rel (0) target = $region9
    $region8: #{tpu_custom_call.1} parent=1 // pred_region
      %23 = vsyncadd [#allocation5], 0
      %s25 = sshll.u32 %s1, 4
      %s26 = int_to_ptr.hbm [resolvable:$true] %s25
      %s27 = sshll.u32 [#allocation4], 4
      %s28 = int_to_ptr.vmem [resolvable:$true] %s27
      %30 = dma.hbm_to_vmem [thread:$0]  %s26, 128, %s28, [#allocation5]
    $region9: #{tpu_custom_call.1} parent=1 // pred_fallthru
      _
    // Predicated region
    $region10: #{tpu_custom_call.1} parent=1 // pred_check
      _
    $region11: #{tpu_custom_call.1} parent=1 // pred_check_branch
      %32 = sbr.rel (0) target = $region13
    $region12: #{tpu_custom_call.1} parent=1 // pred_region
      %34 = dma.done [#allocation3], 128
    $region13: #{tpu_custom_call.1} parent=1 // pred_fallthru
      _
    // Predicated region
    $region14: #{tpu_custom_call.1} parent=1 // pred_check
      _
    $region15: #{tpu_custom_call.1} parent=1 // pred_check_branch
      %36 = sbr.rel (0) target = $region17
    $region16: #{tpu_custom_call.1} parent=1 // pred_region
      %38 = dma.done [#allocation5], 128
    $region17: #{tpu_custom_call.1} parent=1 // pred_fallthru
      _
    %v39 = vld [vmem:[#allocation2] sm:$0xff]
    %v40 = vld [vmem:[#allocation4] sm:$0xff]
    %vm41 = vcmask 261120
    %v42 = vsel %vm41, %v39, -inf
    %43 = vmax.xlane.f32.xlu0 %v42
    %v44 = vpop.xlane.xlu0 %43
    %v45 = vsub.f32 %v39, %v44
    %v46 = vsel %vm41, %v40, -inf
    %47 = vmax.xlane.f32.xlu0 %v46
    %v48 = vpop.xlane.xlu0 %47
    %v49 = vsub.f32 %v40, %v48
    %v50 = vmul.f32 %v45, 1.442695
    %v51 = vpow.pop %v50
    %v52 = vsel %vm41, %v51, 0.0
    %53 = vadd.xlane.f32.xlu0 %v52
    %v54 = vpop.xlane.xlu0 %53
    %v55 = vmul.f32 %v49, 1.442695
    %v56 = vpow.pop %v55
    %v57 = vsel %vm41, %v56, 0.0
    %58 = vadd.xlane.f32.xlu0 %v57
    %v59 = vpop.xlane.xlu0 %58
    %v60 = vadd.f32 %v45, %v49
    %v61 = vmul.f32 %v60, 0.5
    %v62 = vmul.f32 %v61, 1.442695
    %v63 = vpow.pop %v62
    %v64 = vsel %vm41, %v63, 0.0
    %65 = vadd.xlane.f32.xlu0 %v64
    %v66 = vpop.xlane.xlu0 %65
    %v67 = vmul.f32 %v54, %v59
    %v68 = vrsqrt.pop %v67
    %v69 = vmul.f32 %v68, %v67
    %v70 = vmul.f32 %v69, %v68
    %v71 = vmul.f32 0.5, %v70
    %v72 = vsub.f32 1.5, %v71
    %v73 = vmul.f32 %v68, %v72
    %v74 = vmul.f32 %v67, %v73
    %vm75 = vcmp.eq.f32.partialorder %v67, inf
    %v76 = vsel %vm75, %v67, %v74
    %vm77 = vcmp.eq.f32.partialorder %v67, 0.0
    %v78 = vand.u32 %v67, 2147483648
    %v79 = vsel %vm77, %v78, %v76
    %v80 = vrcp.pop %v79
    %v81 = vmul.f32 %v79, %v80
    %v82 = vsub.f32 1.0, %v81
    %v83 = vmul.f32 %v80, %v82
    %v84 = vadd.f32 %v80, %v83
    %vm85 = vweird.f32 %v79
    %vm86 = vweird.f32 %v80
    %vm87 = vmor %vm85, %vm86
    %v88 = vsel %vm87, %v80, %v84
    %v89 = vand.u32 2147483647, %v79
    %vm90 = vcmp.eq.f32.partialorder %v89, 8.507059e+37
    %v91 = vand.u32 %v79, 2147483648
    %v92 = vor.u32 1.1754944e-38, %v91
    %v93 = vsel %vm90, %v92, %v88
    %v94 = vmul.f32 %v66, %v93
    %vm95 = vcmask 7168
    %96 = vst.msk [vmem:[%s2] sm:$0xff] %vm95, %v94
    // Predicated region
    $region18: #{tpu_custom_call.1} parent=1 // pred_check
      _
    $region19: #{tpu_custom_call.1} parent=1 // pred_check_branch
      %98 = sbr.rel (0) target = $region21
    $region20: #{tpu_custom_call.1} parent=1 // pred_region
      _
    $region21: #{tpu_custom_call.1} parent=1 // pred_fallthru
      _
    // Predicated region
    $region22: #{tpu_custom_call.1} parent=1 // pred_check
      _
    $region23: #{tpu_custom_call.1} parent=1 // pred_check_branch
      %100 = sbr.rel (0) target = $region25
    $region24: #{tpu_custom_call.1} parent=1 // pred_region
      _
    $region25: #{tpu_custom_call.1} parent=1 // pred_fallthru
      _
    %101 = vsyncpa [#allocation3], 1
    %102 = vsyncpa [#allocation5], 1

</llo_original>
